<compile_context>
chip_gen: v6e
topology: v6e:2x2x1
jax: 0.10.0
libtpu: 0.0.40
codegen_flags: <defaults>
</compile_context>

<pallas_src>
import functools
import math

import jax
import jax.numpy as jnp
from jax import lax
from jax.experimental import pallas as pl
from jax.experimental.pallas import tpu as pltpu


_LANE_WIDTH = 1024      # lane-dense slab width (multiple of 256 so the sin/cos halves are 128-aligned)
_MAX_TILE_ROWS = 512    # 512 x 1024 x 4B = 2 MiB per block


def _splitmix32(x):
    """uint32 counter -> well-mixed uint32 word (SplitMix32 finalizer)."""
    x = x + jnp.uint32(0x9E3779B9)
    x = x ^ (x >> jnp.uint32(16))
    x = x * jnp.uint32(0x21F0AAAD)
    x = x ^ (x >> jnp.uint32(15))
    x = x * jnp.uint32(0x735A2D97)
    x = x ^ (x >> jnp.uint32(15))
    return x


def _bits_to_unit_float(bits):
    """uint32 bits -> float32 uniform in [0, 1) via exponent bitcast (no int->float convert)."""
    mant = (bits >> jnp.uint32(9)) | jnp.uint32(0x3F800000)          # bit pattern in [1.0, 2.0)
    return lax.bitcast_convert_type(mant, jnp.float32) - jnp.float32(1.0)


def _gaussian_noise_kernel(seed_ref, x_ref, o_ref, *, std):
    rows, width = x_ref.shape
    half = width // 2

    # Per-(seed, element) counter-based PRNG: every grid step / element gets a unique
    # counter, so blocks are independent and the grid can be sharded "parallel".
    key = _splitmix32(seed_ref[0].astype(jnp.uint32))

    base = pl.program_id(0) * (rows * half)
    r_ids = lax.broadcasted_iota(jnp.int32, (rows, half), 0)
    c_ids = lax.broadcasted_iota(jnp.int32, (rows, half), 1)
    pair_idx = base + r_ids * half + c_ids                           # unique pair counter
    c_even = pair_idx.astype(jnp.uint32) * jnp.uint32(2)

    b1 = _splitmix32(c_even ^ key)
    b2 = _splitmix32((c_even | jnp.uint32(1)) ^ key)

    u1 = jnp.float32(1.0) - _bits_to_unit_float(b1)                  # (0, 1]: log() is safe
    u2 = _bits_to_unit_float(b2)                                     # [0, 1)

    # Box-Muller, both branches: one (u1, u2) pair -> two independent N(0, 1) samples.
    r = jnp.sqrt(jnp.float32(-2.0) * jnp.log(u1))
    theta = jnp.float32(2.0 * math.pi) * u2
    z1 = r * jnp.cos(theta)
    z2 = r * jnp.sin(theta)

    std_f = jnp.float32(std)
    x_lo = x_ref[:, 0:half].astype(jnp.float32)
    x_hi = x_ref[:, half:width].astype(jnp.float32)
    o_ref[:, 0:half] = (x_lo + std_f * z1).astype(o_ref.dtype)
    o_ref[:, half:width] = (x_hi + std_f * z2).astype(o_ref.dtype)


def gaussian_noise(x, std, seed=0):
    """x + N(0, std) elementwise; noise is sampled on-chip inside the Pallas kernel."""
    orig_shape = x.shape
    n = x.size
    w = _LANE_WIDTH

    flat = x.reshape(-1)
    padded_n = pl.cdiv(n, w) * w
    rows = padded_n // w
    if rows <= _MAX_TILE_ROWS:
        tile_rows = rows                      # single full-array block (always legal)
    else:
        tile_rows = _MAX_TILE_ROWS
        rows = pl.cdiv(rows, tile_rows) * tile_rows
        padded_n = rows * w

    if padded_n != n:
        # TODO(synk): mask the tail block in-kernel instead of materializing pad + slice.
        flat = jnp.pad(flat, (0, padded_n - n))
    x2d = flat.reshape(rows, w)

    seed_arr = jnp.array([seed], dtype=jnp.int32)
    grid = (rows // tile_rows,)

    out2d = pl.pallas_call(
        functools.partial(_gaussian_noise_kernel, std=float(std)),
        out_shape=jax.ShapeDtypeStruct((rows, w), x.dtype),
        grid_spec=pltpu.PrefetchScalarGridSpec(
            num_scalar_prefetch=1,            # seed lands in SMEM
            grid=grid,
            in_specs=[pl.BlockSpec((tile_rows, w), lambda i, seed: (i, 0))],
            out_specs=pl.BlockSpec((tile_rows, w), lambda i, seed: (i, 0)),
        ),
        compiler_params=pltpu.CompilerParams(
            dimension_semantics=("parallel",),  # counter-based PRNG -> blocks independent
        ),
    )(seed_arr, x2d)

    out_flat = out2d.reshape(-1)
    if padded_n != n:
        out_flat = out_flat[:n]
    return out_flat.reshape(orig_shape)


if __name__ == "__main__":
    key = jax.random.PRNGKey(0)
    # NCHW input, consistent with the module being applied to arbitrary tensors.
    x = jax.random.normal(key, (2, 4, 16, 16), dtype=jnp.float32)
    std = 0.1  # GaussianNoise(std=0.1, device=...)

    y = gaussian_noise(x, std, seed=0)
    y = jax.block_until_ready(y)

    # Sanity: shape/dtype preserved, noise has roughly the right scale.
    assert y.shape == x.shape and y.dtype == x.dtype
    noise = y - x
    assert float(jnp.abs(jnp.mean(noise))) < 0.05
    assert 0.05 < float(jnp.std(noise)) < 0.2

    print("KERNEL_OK")
</pallas_src>

<mosaic_0001>
module attributes {stable_mosaic.version = 11 : i64} {
  func.func @_gaussian_noise_kernel(%arg0: i32, %arg1: memref<1xi32, #tpu.memory_space<smem>>, %arg2: memref<2x1024xf32, #tpu.memory_space<vmem>>, %arg3: memref<2x1024xf32, #tpu.memory_space<vmem>>) attributes {dimension_semantics = [#tpu.dimension_semantics<parallel>], iteration_bounds = array<i64: 1>, scalar_prefetch = 1 : i64, scratch_operands = 0 : i64, tpu.core_type = #tpu.core_type<tc>, window_params = [{transform_indices = @transform_0, window_bounds = array<i64: 2, 1024>}, {transform_indices = @transform_1, window_bounds = array<i64: 2, 1024>}]} {
    %c0 = arith.constant 0 : index
    %0 = memref.load %arg1[%c0] : memref<1xi32, #tpu.memory_space<smem>>
    %c-1640531527_i32 = arith.constant -1640531527 : i32
    %1 = arith.addi %0, %c-1640531527_i32 : i32
    %c16_i32 = arith.constant 16 : i32
    %2 = arith.shrui %1, %c16_i32 : i32
    %3 = arith.xori %1, %2 : i32
    %c569420461_i32 = arith.constant 569420461 : i32
    %4 = arith.muli %3, %c569420461_i32 : i32
    %c15_i32 = arith.constant 15 : i32
    %5 = arith.shrui %4, %c15_i32 : i32
    %6 = arith.xori %4, %5 : i32
    %c1935289751_i32 = arith.constant 1935289751 : i32
    %7 = arith.muli %6, %c1935289751_i32 : i32
    %c15_i32_0 = arith.constant 15 : i32
    %8 = arith.shrui %7, %c15_i32_0 : i32
    %9 = arith.xori %7, %8 : i32
    %c1024_i32 = arith.constant 1024 : i32
    %10 = arith.muli %arg0, %c1024_i32 : i32
    %11 = tpu.iota {dimensions = array<i32: 0>} : vector<2x512xi32>
    %12 = tpu.iota {dimensions = array<i32: 1>} : vector<2x512xi32>
    %c512_i32 = arith.constant 512 : i32
    %13 = vector.broadcast %c512_i32 : i32 to vector<2x512xi32>
    %14 = arith.muli %11, %13 : vector<2x512xi32>
    %15 = vector.broadcast %10 : i32 to vector<2x512xi32>
    %16 = arith.addi %15, %14 : vector<2x512xi32>
    %17 = arith.addi %16, %12 : vector<2x512xi32>
    %c2_i32 = arith.constant 2 : i32
    %18 = vector.broadcast %c2_i32 : i32 to vector<2x512xi32>
    %19 = arith.muli %17, %18 : vector<2x512xi32>
    %20 = vector.broadcast %9 : i32 to vector<2x512xi32>
    %21 = arith.xori %19, %20 : vector<2x512xi32>
    %c-1640531527_i32_1 = arith.constant -1640531527 : i32
    %22 = vector.broadcast %c-1640531527_i32_1 : i32 to vector<2x512xi32>
    %23 = arith.addi %21, %22 : vector<2x512xi32>
    %c16_i32_2 = arith.constant 16 : i32
    %24 = vector.broadcast %c16_i32_2 : i32 to vector<2x512xi32>
    %25 = arith.shrui %23, %24 : vector<2x512xi32>
    %26 = arith.xori %23, %25 : vector<2x512xi32>
    %c569420461_i32_3 = arith.constant 569420461 : i32
    %27 = vector.broadcast %c569420461_i32_3 : i32 to vector<2x512xi32>
    %28 = arith.muli %26, %27 : vector<2x512xi32>
    %c15_i32_4 = arith.constant 15 : i32
    %29 = vector.broadcast %c15_i32_4 : i32 to vector<2x512xi32>
    %30 = arith.shrui %28, %29 : vector<2x512xi32>
    %31 = arith.xori %28, %30 : vector<2x512xi32>
    %c1935289751_i32_5 = arith.constant 1935289751 : i32
    %32 = vector.broadcast %c1935289751_i32_5 : i32 to vector<2x512xi32>
    %33 = arith.muli %31, %32 : vector<2x512xi32>
    %c15_i32_6 = arith.constant 15 : i32
    %34 = vector.broadcast %c15_i32_6 : i32 to vector<2x512xi32>
    %35 = arith.shrui %33, %34 : vector<2x512xi32>
    %36 = arith.xori %33, %35 : vector<2x512xi32>
    %c1_i32 = arith.constant 1 : i32
    %37 = vector.broadcast %c1_i32 : i32 to vector<2x512xi32>
    %38 = arith.ori %19, %37 : vector<2x512xi32>
    %39 = vector.broadcast %9 : i32 to vector<2x512xi32>
    %40 = arith.xori %38, %39 : vector<2x512xi32>
    %c-1640531527_i32_7 = arith.constant -1640531527 : i32
    %41 = vector.broadcast %c-1640531527_i32_7 : i32 to vector<2x512xi32>
    %42 = arith.addi %40, %41 : vector<2x512xi32>
    %c16_i32_8 = arith.constant 16 : i32
    %43 = vector.broadcast %c16_i32_8 : i32 to vector<2x512xi32>
    %44 = arith.shrui %42, %43 : vector<2x512xi32>
    %45 = arith.xori %42, %44 : vector<2x512xi32>
    %c569420461_i32_9 = arith.constant 569420461 : i32
    %46 = vector.broadcast %c569420461_i32_9 : i32 to vector<2x512xi32>
    %47 = arith.muli %45, %46 : vector<2x512xi32>
    %c15_i32_10 = arith.constant 15 : i32
    %48 = vector.broadcast %c15_i32_10 : i32 to vector<2x512xi32>
    %49 = arith.shrui %47, %48 : vector<2x512xi32>
    %50 = arith.xori %47, %49 : vector<2x512xi32>
    %c1935289751_i32_11 = arith.constant 1935289751 : i32
    %51 = vector.broadcast %c1935289751_i32_11 : i32 to vector<2x512xi32>
    %52 = arith.muli %50, %51 : vector<2x512xi32>
    %c15_i32_12 = arith.constant 15 : i32
    %53 = vector.broadcast %c15_i32_12 : i32 to vector<2x512xi32>
    %54 = arith.shrui %52, %53 : vector<2x512xi32>
    %55 = arith.xori %52, %54 : vector<2x512xi32>
    %c9_i32 = arith.constant 9 : i32
    %56 = vector.broadcast %c9_i32 : i32 to vector<2x512xi32>
    %57 = arith.shrui %36, %56 : vector<2x512xi32>
    %c1065353216_i32 = arith.constant 1065353216 : i32
    %58 = vector.broadcast %c1065353216_i32 : i32 to vector<2x512xi32>
    %59 = arith.ori %57, %58 : vector<2x512xi32>
    %60 = tpu.bitcast %59 : vector<2x512xi32> -> vector<2x512xf32>
    %cst = arith.constant 1.000000e+00 : f32
    %61 = vector.broadcast %cst : f32 to vector<2x512xf32>
    %62 = arith.subf %60, %61 : vector<2x512xf32>
    %cst_13 = arith.constant 1.000000e+00 : f32
    %63 = vector.broadcast %cst_13 : f32 to vector<2x512xf32>
    %64 = arith.subf %63, %62 : vector<2x512xf32>
    %c9_i32_14 = arith.constant 9 : i32
    %65 = vector.broadcast %c9_i32_14 : i32 to vector<2x512xi32>
    %66 = arith.shrui %55, %65 : vector<2x512xi32>
    %c1065353216_i32_15 = arith.constant 1065353216 : i32
    %67 = vector.broadcast %c1065353216_i32_15 : i32 to vector<2x512xi32>
    %68 = arith.ori %66, %67 : vector<2x512xi32>
    %69 = tpu.bitcast %68 : vector<2x512xi32> -> vector<2x512xf32>
    %cst_16 = arith.constant 1.000000e+00 : f32
    %70 = vector.broadcast %cst_16 : f32 to vector<2x512xf32>
    %71 = arith.subf %69, %70 : vector<2x512xf32>
    %72 = math.log %64 : vector<2x512xf32>
    %cst_17 = arith.constant -2.000000e+00 : f32
    %73 = vector.broadcast %cst_17 : f32 to vector<2x512xf32>
    %74 = arith.mulf %73, %72 : vector<2x512xf32>
    %75 = math.sqrt %74 : vector<2x512xf32>
    %cst_18 = arith.constant 6.28318548 : f32
    %76 = vector.broadcast %cst_18 : f32 to vector<2x512xf32>
    %77 = arith.mulf %76, %71 : vector<2x512xf32>
    %78 = math.cos %77 : vector<2x512xf32>
    %79 = arith.mulf %75, %78 : vector<2x512xf32>
    %80 = math.sin %77 : vector<2x512xf32>
    %81 = arith.mulf %75, %80 : vector<2x512xf32>
    %c0_19 = arith.constant 0 : index
    %c0_20 = arith.constant 0 : index
    %82 = vector.load %arg2[%c0_19, %c0_20] : memref<2x1024xf32, #tpu.memory_space<vmem>>, vector<2x512xf32>
    %c0_21 = arith.constant 0 : index
    %c512 = arith.constant 512 : index
    %83 = vector.load %arg2[%c0_21, %c512] : memref<2x1024xf32, #tpu.memory_space<vmem>>, vector<2x512xf32>
    %cst_22 = arith.constant 1.000000e-01 : f32
    %84 = vector.broadcast %cst_22 : f32 to vector<2x512xf32>
    %85 = arith.mulf %84, %79 : vector<2x512xf32>
    %86 = arith.addf %82, %85 : vector<2x512xf32>
    %c0_23 = arith.constant 0 : index
    %c0_24 = arith.constant 0 : index
    %87 = vector.load %arg3[%c0_23, %c0_24] : memref<2x1024xf32, #tpu.memory_space<vmem>>, vector<2x512xf32>
    tpu.vector_store %arg3[%c0_23, %c0_24], %86 {strides = array<i32>} : memref<2x1024xf32, #tpu.memory_space<vmem>>, vector<2x512xf32>,
    %cst_25 = arith.constant 1.000000e-01 : f32
    %88 = vector.broadcast %cst_25 : f32 to vector<2x512xf32>
    %89 = arith.mulf %88, %81 : vector<2x512xf32>
    %90 = arith.addf %83, %89 : vector<2x512xf32>
    %c0_26 = arith.constant 0 : index
    %c512_27 = arith.constant 512 : index
    %91 = vector.load %arg3[%c0_26, %c512_27] : memref<2x1024xf32, #tpu.memory_space<vmem>>, vector<2x512xf32>
    tpu.vector_store %arg3[%c0_26, %c512_27], %90 {strides = array<i32>} : memref<2x1024xf32, #tpu.memory_space<vmem>>, vector<2x512xf32>,
    return
  }
  func.func @transform_0(%arg0: i32, %arg1: memref<1xi32, #tpu.memory_space<smem>>) -> (i32, i32) {
    %c0_i32 = arith.constant 0 : i32
    %c0_i32_0 = arith.constant 0 : i32
    return %arg0, %c0_i32 : i32, i32
  }
  func.func @transform_1(%arg0: i32, %arg1: memref<1xi32, #tpu.memory_space<smem>>) -> (i32, i32) {
    %c0_i32 = arith.constant 0 : i32
    %c0_i32_0 = arith.constant 0 : i32
    return %arg0, %c0_i32 : i32, i32
  }
}

</mosaic_0001>

<llo_original>
// kernel: tpu_custom_call.1
$region0: #{tpu_custom_call.1}
  #allocation0 [shape = 'u32[]', space=smem, size = 0x4, offset = 0x4, fixed_abs, tag = 'smem constant byte address 0x4 - core index']
  #allocation1 [shape = 'u32[144,128]{1,0:T(1,128)}', space=vmem, size = 0x12000, scoped, tag = 'internal scratch']
  #allocation2 [shape = 's32[1]{0}', space=sflag, size = 0x4, scoped, tag = 'scoped memory for tpu_custom_call.1']
  #allocation3 [shape = 's32[1]{0:T(128)S(6)}', space=smem, size = 0x200, scoped, tag = 'prefetched SMEM operand 0']
  %s0 = inlined_call_operand.<no memory space> [shape: s32[1], index: 0, kind: input, shape index: {}]
  %s1 = inlined_call_operand.hbm [shape: f32[2,1024], index: 1, kind: input, shape index: {}]
  %s2 = inlined_call_operand.hbm [shape: f32[2,1024], index: 2, kind: output, shape index: {}]
  %s3 = sld [smem:[#allocation0]]
  $region18: #{tpu_custom_call.1} parent=0
    _
  %s5 = ssub.s32 1, %s3
  %s6 = scalar_select 0, %s5, %s3
  %7 = sst [smem:[#allocation3]] %s0
  $region1: #{tpu_custom_call.1} parent=0
    #allocation4 [shape = 'u8[8192]{0}', space=vmem, size = 0x2000, scoped, tag = 'input window, operand 1, single buffered']
    #allocation5 [shape = 's32[1]{0}', space=sflag, size = 0x4, scoped, tag = 'scoped memory for tpu_custom_call.1']
    #allocation6 [shape = 's32[1]{0}', space=sflag, size = 0x4, scoped, tag = 'scoped memory for tpu_custom_call.1']
    #allocation7 [shape = 'u8[8192]{0}', space=vmem, size = 0x2000, scoped, tag = 'output window, operand 0, single buffered']
    %8 = vsyncpa [#allocation5], 0
    %9 = vsyncpa [#allocation6], 0
    // Predicated region
    $region2: #{tpu_custom_call.1} parent=1 // pred_check
      _
    $region3: #{tpu_custom_call.1} parent=1 // pred_check_branch
      %11 = sbr.rel (0) target = $region5
    $region4: #{tpu_custom_call.1} parent=1 // pred_region
      %s13 = ssub.s32 256, 256
      %14 = vsyncadd [#allocation5], %s13
      %s16 = sshll.u32 [#allocation4], 4
      %s17 = int_to_ptr.vmem [resolvable:$true] %s16
      %19 = dma.hbm_to_vmem [thread:$0]  %s1, 256, %s17, [#allocation5]
    $region5: #{tpu_custom_call.1} parent=1 // pred_fallthru
      _
    // Predicated region
    $region6: #{tpu_custom_call.1} parent=1 // pred_check
      _
    $region7: #{tpu_custom_call.1} parent=1 // pred_check_branch
      %21 = sbr.rel (0) target = $region9
    $region8: #{tpu_custom_call.1} parent=1 // pred_region
      %22 = dma.done [#allocation5], 256
    $region9: #{tpu_custom_call.1} parent=1 // pred_fallthru
      _
    %s23 = sld [smem:[#allocation3]]
    %s24 = sadd.s32 %s23, 2654435769
    %s25 = sshrl.u32 %s24, 16
    %s26 = sxor.u32 %s24, %s25
    %s27 = smul.u32 %s26, 569420461
    %s28 = sshrl.u32 %s27, 15
    %s29 = sxor.u32 %s27, %s28
    %s30 = smul.u32 %s29, 1935289751
    %s31 = sshrl.u32 %s30, 15
    %s32 = sxor.u32 %s30, %s31
    %s33 = smul.u32 0, 1024
    %v34 = vlaneseq
    %v35 = vshrl.u32 %v34, 7
    %v36 = vlaneseq
    %v37 = vand.u32 %v36, 127
    %v38 = vadd.s32 %v37, 128
    %v39 = vadd.s32 %v37, 256
    %v40 = vadd.s32 %v37, 384
    %v41 = vmul.u32 %v35, 512
    %v42 = vstv %s33
    %v43 = vadd.s32 %v42, %v41
    %v44 = vadd.s32 %v43, %v37
    %v45 = vadd.s32 %v43, %v38
    %v46 = vadd.s32 %v43, %v39
    %v47 = vadd.s32 %v43, %v40
    %v48 = vmul.u32 %v44, 2
    %v49 = vmul.u32 %v45, 2
    %v50 = vmul.u32 %v46, 2
    %v51 = vmul.u32 %v47, 2
    %v52 = vstv %s32
    %v53 = vxor.u32 %v48, %v52
    %v54 = vxor.u32 %v49, %v52
    %v55 = vxor.u32 %v50, %v52
    %v56 = vxor.u32 %v51, %v52
    %v57 = vadd.s32 %v53, 2654435769
    %v58 = vadd.s32 %v54, 2654435769
    %v59 = vadd.s32 %v55, 2654435769
    %v60 = vadd.s32 %v56, 2654435769
    %v61 = vshrl.u32 %v57, 16
    %v62 = vshrl.u32 %v58, 16
    %v63 = vshrl.u32 %v59, 16
    %v64 = vshrl.u32 %v60, 16
    %v65 = vxor.u32 %v57, %v61
    %v66 = vxor.u32 %v58, %v62
    %v67 = vxor.u32 %v59, %v63
    %v68 = vxor.u32 %v60, %v64
    %v69 = vmul.u32 %v65, 569420461
    %v70 = vmul.u32 %v66, 569420461
    %v71 = vmul.u32 %v67, 569420461
    %v72 = vmul.u32 %v68, 569420461
    %v73 = vshrl.u32 %v69, 15
    %v74 = vshrl.u32 %v70, 15
    %v75 = vshrl.u32 %v71, 15
    %v76 = vshrl.u32 %v72, 15
    %v77 = vxor.u32 %v69, %v73
    %v78 = vxor.u32 %v70, %v74
    %v79 = vxor.u32 %v71, %v75
    %v80 = vxor.u32 %v72, %v76
    %v81 = vmul.u32 %v77, 1935289751
    %v82 = vmul.u32 %v78, 1935289751
    %v83 = vmul.u32 %v79, 1935289751
    %v84 = vmul.u32 %v80, 1935289751
    %v85 = vshrl.u32 %v81, 15
    %v86 = vshrl.u32 %v82, 15
    %v87 = vshrl.u32 %v83, 15
    %v88 = vshrl.u32 %v84, 15
    %v89 = vxor.u32 %v81, %v85
    %v90 = vxor.u32 %v82, %v86
    %v91 = vxor.u32 %v83, %v87
    %v92 = vxor.u32 %v84, %v88
    %v93 = vor.u32 %v48, 1
    %v94 = vor.u32 %v49, 1
    %v95 = vor.u32 %v50, 1
    %v96 = vor.u32 %v51, 1
    %v97 = vxor.u32 %v93, %v52
    %v98 = vxor.u32 %v94, %v52
    %v99 = vxor.u32 %v95, %v52
    %v100 = vxor.u32 %v96, %v52
    %v101 = vadd.s32 %v97, 2654435769
    %v102 = vadd.s32 %v98, 2654435769
    %v103 = vadd.s32 %v99, 2654435769
    %v104 = vadd.s32 %v100, 2654435769
    %v105 = vshrl.u32 %v101, 16
    %v106 = vshrl.u32 %v102, 16
    %v107 = vshrl.u32 %v103, 16
    %v108 = vshrl.u32 %v104, 16
    %v109 = vxor.u32 %v101, %v105
    %v110 = vxor.u32 %v102, %v106
    %v111 = vxor.u32 %v103, %v107
    %v112 = vxor.u32 %v104, %v108
    %v113 = vmul.u32 %v109, 569420461
    %v114 = vmul.u32 %v110, 569420461
    %v115 = vmul.u32 %v111, 569420461
    %v116 = vmul.u32 %v112, 569420461
    %v117 = vshrl.u32 %v113, 15
    %v118 = vshrl.u32 %v114, 15
    %v119 = vshrl.u32 %v115, 15
    %v120 = vshrl.u32 %v116, 15
    %v121 = vxor.u32 %v113, %v117
    %v122 = vxor.u32 %v114, %v118
    %v123 = vxor.u32 %v115, %v119
    %v124 = vxor.u32 %v116, %v120
    %v125 = vmul.u32 %v121, 1935289751
    %v126 = vmul.u32 %v122, 1935289751
    %v127 = vmul.u32 %v123, 1935289751
    %v128 = vmul.u32 %v124, 1935289751
    %v129 = vshrl.u32 %v125, 15
    %v130 = vshrl.u32 %v126, 15
    %v131 = vshrl.u32 %v127, 15
    %v132 = vshrl.u32 %v128, 15
    %v133 = vxor.u32 %v125, %v129
    %v134 = vxor.u32 %v126, %v130
    %v135 = vxor.u32 %v127, %v131
    %v136 = vxor.u32 %v128, %v132
    %v137 = vshrl.u32 %v89, 9
    %v138 = vshrl.u32 %v90, 9
    %v139 = vshrl.u32 %v91, 9
    %v140 = vshrl.u32 %v92, 9
    %v141 = vor.u32 %v137, 1065353216
    %v142 = vor.u32 %v138, 1065353216
    %v143 = vor.u32 %v139, 1065353216
    %v144 = vor.u32 %v140, 1065353216
    %v149 = vsub.f32 %v141, 1.0
    %v150 = vsub.f32 %v142, 1.0
    %v151 = vsub.f32 %v143, 1.0
    %v152 = vsub.f32 %v144, 1.0
    %v153 = vsub.f32 1.0, %v149
    %v154 = vsub.f32 1.0, %v150
    %v155 = vsub.f32 1.0, %v151
    %v156 = vsub.f32 1.0, %v152
    %v157 = vshrl.u32 %v133, 9
    %v158 = vshrl.u32 %v134, 9
    %v159 = vshrl.u32 %v135, 9
    %v160 = vshrl.u32 %v136, 9
    %v161 = vor.u32 %v157, 1065353216
    %v162 = vor.u32 %v158, 1065353216
    %v163 = vor.u32 %v159, 1065353216
    %v164 = vor.u32 %v160, 1065353216
    %v169 = vsub.f32 %v161, 1.0
    %v170 = vsub.f32 %v162, 1.0
    %v171 = vsub.f32 %v163, 1.0
    %v172 = vsub.f32 %v164, 1.0
    %v173 = vlog2.pop %v153
    %v174 = vmul.f32 %v173, 0.6931472
    %v175 = vlog2.pop %v154
    %v176 = vmul.f32 %v175, 0.6931472
    %v177 = vlog2.pop %v155
    %v178 = vmul.f32 %v177, 0.6931472
    %v179 = vlog2.pop %v156
    %v180 = vmul.f32 %v179, 0.6931472
    %v181 = vmul.f32 %v174, -2.0
    %v182 = vmul.f32 %v176, -2.0
    %v183 = vmul.f32 %v178, -2.0
    %v184 = vmul.f32 %v180, -2.0
    %v185 = vrsqrt.pop %v181
    %v186 = vmul.f32 %v181, %v185
    %vm187 = vcmp.eq.f32.partialorder %v181, inf
    %v188 = vsel %vm187, %v181, %v186
    %vm189 = vcmp.eq.f32.partialorder %v181, 0.0
    %v190 = vand.u32 %v181, 2147483648
    %v191 = vsel %vm189, %v190, %v188
    %v192 = vrsqrt.pop %v182
    %v193 = vmul.f32 %v182, %v192
    %vm194 = vcmp.eq.f32.partialorder %v182, inf
    %v195 = vsel %vm194, %v182, %v193
    %vm196 = vcmp.eq.f32.partialorder %v182, 0.0
    %v197 = vand.u32 %v182, 2147483648
    %v198 = vsel %vm196, %v197, %v195
    %v199 = vrsqrt.pop %v183
    %v200 = vmul.f32 %v183, %v199
    %vm201 = vcmp.eq.f32.partialorder %v183, inf
    %v202 = vsel %vm201, %v183, %v200
    %vm203 = vcmp.eq.f32.partialorder %v183, 0.0
    %v204 = vand.u32 %v183, 2147483648
    %v205 = vsel %vm203, %v204, %v202
    %v206 = vrsqrt.pop %v184
    %v207 = vmul.f32 %v184, %v206
    %vm208 = vcmp.eq.f32.partialorder %v184, inf
    %v209 = vsel %vm208, %v184, %v207
    %vm210 = vcmp.eq.f32.partialorder %v184, 0.0
    %v211 = vand.u32 %v184, 2147483648
    %v212 = vsel %vm210, %v211, %v209
    %v213 = vmul.f32 %v169, 6.2831855
    %v214 = vmul.f32 %v170, 6.2831855
    %v215 = vmul.f32 %v171, 6.2831855
    %v216 = vmul.f32 %v172, 6.2831855
    %v217 = vand.u32 2147483647, %v213
    %vm218 = vcmp.le.f32.partialorder %v217, 0.7853982
    %vm219 = vcmp.lt.s32.totalorder %v213, 0
    %v220 = vand.u32 %v213, 2139095040
    %v221 = vshrl.u32 %v220, 23
    %v222 = vsub.s32 %v221, 127
    %v223 = vand.u32 2147483647, %v213
    %v224 = vand.u32 %v223, 8388607
    %v225 = vor.u32 %v224, 8388608
    %v226 = vsub.s32 0, %v225
    %v227 = vadd.s32 %v222, 1
    %vm228 = vcmp.gt.s32.totalorder %v227, 0
    %v229 = vsel %vm228, %v227, 0
    %v230 = vshrl.u32 %v229, 5
    %v231 = vand.u32 %v229, 31
    %v232 = vsub.s32 32, %v231
    %v233 = vshrl.u32 683565275, %v232
    %v234 = vshll.u32 683565275, %v231
    %v235 = vshrl.u32 2475754826, %v232
    %v236 = vor.u32 %v234, %v235
    %v237 = vshll.u32 2475754826, %v231
    %v238 = vshrl.u32 2131351028, %v232
    %v239 = vor.u32 %v237, %v238
    %v240 = vshll.u32 2131351028, %v231
    %v241 = vshrl.u32 2102212464, %v232
    %v242 = vor.u32 %v240, %v241
    %v243 = vshll.u32 2102212464, %v231
    %v244 = vshrl.u32 920167782, %v232
    %v245 = vor.u32 %v243, %v244
    %v246 = vshll.u32 920167782, %v231
    %v247 = vshrl.u32 1326507024, %v232
    %v248 = vor.u32 %v246, %v247
    %vm249 = vcmp.lt.s32.totalorder %v230, 1
    %vm250 = vcmp.lt.s32.totalorder %v230, 2
    %vm251 = vcmp.lt.s32.totalorder %v230, 3
    %vm252 = vcmp.lt.s32.totalorder %v230, 4
    %v253 = vsel %vm249, %v233, %v236
    %v254 = vsel %vm252, %v242, 2102212464
    %v255 = vsel %vm251, %v239, %v254
    %v256 = vsel %vm250, %v253, %v255
    %v257 = vsel %vm249, %v236, %v239
    %v258 = vsel %vm252, %v245, 920167782
    %v259 = vsel %vm251, %v242, %v258
    %v260 = vsel %vm250, %v257, %v259
    %v261 = vsel %vm249, %v239, %v242
    %v262 = vsel %vm252, %v248, 1326507024
    %v263 = vsel %vm251, %v245, %v262
    %v264 = vsel %vm250, %v261, %v263
    %v265 = vshll.u32 %v225, 8
    %v266 = vmul.u32.u64.compose %v265, %v264
    %v267 = vextract.low.u32 %v266
    %v268 = vextract.high.u32 %v266
    %v269 = vmul.u32.u64.compose %v265, %v260
    %v270 = vextract.low.u32 %v269
    %v271 = vextract.high.u32 %v269
    %v272 = vmul.u32 %v265, %v256
    %v273 = vadd.s32 %v268, %v270
    %vm274 = vc.u32 %v268, %v270
    %v275 = vadd.s32 %v271, 1
    %v276 = vsel %vm274, %v275, %v271
    %v277 = vadd.s32 %v272, %v276
    %v278 = vadd.s32 %v277, 536870912
    %v279 = vshrl.u32 %v278, 30
    %v280 = vshll.u32 %v279, 30
    %v281 = vsub.s32 %v277, %v280
    %vm282 = vcmp.lt.s32.totalorder %v281, 0
    %v283 = vsub.s32 0, %v281
    %v284 = vsel %vm282, %v283, %v281
    %v285 = vclz %v284
    %v286 = vsub.s32 %v285, 2
    %vm287 = vcmp.gt.s32.totalorder 0, %v286
    %v288 = vsel %vm287, 0, %v286
    %v289 = vsub.s32 32, %v288
    %v290 = vshll.u32 %v281, %v288
    %v291 = vshrl.u32 %v273, %v289
    %v292 = vor.u32 %v290, %v291
    %v293 = vsub.s32 4294967266, %v288
    %v294 = vadd.s32 %v293, 127
    %v295 = vshll.u32 %v294, 23
    %v296 = vor.u32 4788187, %v295
    %v297 = vand.u32 2147483647, %v296
    %v299 = vcvt.s32.f32 %v292
    %v300 = vmul.f32 %v299, %v297
    %v301 = vxor.u32 %v300, 2147483648
    %v302 = vsel %vm219, %v301, %v300
    %v303 = vsub.s32 4, %v279
    %v304 = vsel %vm219, %v303, %v279
    %v305 = vsel %vm218, %v213, %v302
    %v306 = vsel %vm218, 0, %v304
    %v307 = vcosq.f32.pop %v305
    %v308 = vsinq.f32.pop %v305
    %vm309 = vweird.f32 %v213
    %v310 = vand.u32 %v306, 3
    %vm311 = vcmp.lt.s32.totalorder %v310, 2
    %vm312 = vcmp.eq.s32.totalorder %v310, 0
    %v313 = vxor.u32 %v308, 2147483648
    %v314 = vsel %vm312, %v307, %v313
    %vm315 = vcmp.eq.s32.totalorder %v310, 2
    %v316 = vxor.u32 %v307, 2147483648
    %v317 = vsel %vm315, %v316, %v308
    %v318 = vsel %vm311, %v314, %v317
    %v319 = vsel %vm309, nan, %v318
    %v320 = vand.u32 2147483647, %v214
    %vm321 = vcmp.le.f32.partialorder %v320, 0.7853982
    %vm322 = vcmp.lt.s32.totalorder %v214, 0
    %v323 = vand.u32 %v214, 2139095040
    %v324 = vshrl.u32 %v323, 23
    %v325 = vsub.s32 %v324, 127
    %v326 = vand.u32 2147483647, %v214
    %v327 = vand.u32 %v326, 8388607
    %v328 = vor.u32 %v327, 8388608
    %v329 = vsub.s32 0, %v328
    %v330 = vadd.s32 %v325, 1
    %vm331 = vcmp.gt.s32.totalorder %v330, 0
    %v332 = vsel %vm331, %v330, 0
    %v333 = vshrl.u32 %v332, 5
    %v334 = vand.u32 %v332, 31
    %v335 = vsub.s32 32, %v334
    %v336 = vshrl.u32 683565275, %v335
    %v337 = vshll.u32 683565275, %v334
    %v338 = vshrl.u32 2475754826, %v335
    %v339 = vor.u32 %v337, %v338
    %v340 = vshll.u32 2475754826, %v334
    %v341 = vshrl.u32 2131351028, %v335
    %v342 = vor.u32 %v340, %v341
    %v343 = vshll.u32 2131351028, %v334
    %v344 = vshrl.u32 2102212464, %v335
    %v345 = vor.u32 %v343, %v344
    %v346 = vshll.u32 2102212464, %v334
    %v347 = vshrl.u32 920167782, %v335
    %v348 = vor.u32 %v346, %v347
    %v349 = vshll.u32 920167782, %v334
    %v350 = vshrl.u32 1326507024, %v335
    %v351 = vor.u32 %v349, %v350
    %vm352 = vcmp.lt.s32.totalorder %v333, 1
    %vm353 = vcmp.lt.s32.totalorder %v333, 2
    %vm354 = vcmp.lt.s32.totalorder %v333, 3
    %vm355 = vcmp.lt.s32.totalorder %v333, 4
    %v356 = vsel %vm352, %v336, %v339
    %v357 = vsel %vm355, %v345, 2102212464
    %v358 = vsel %vm354, %v342, %v357
    %v359 = vsel %vm353, %v356, %v358
    %v360 = vsel %vm352, %v339, %v342
    %v361 = vsel %vm355, %v348, 920167782
    %v362 = vsel %vm354, %v345, %v361
    %v363 = vsel %vm353, %v360, %v362
    %v364 = vsel %vm352, %v342, %v345
    %v365 = vsel %vm355, %v351, 1326507024
    %v366 = vsel %vm354, %v348, %v365
    %v367 = vsel %vm353, %v364, %v366
    %v368 = vshll.u32 %v328, 8
    %v369 = vmul.u32.u64.compose %v368, %v367
    %v370 = vextract.low.u32 %v369
    %v371 = vextract.high.u32 %v369
    %v372 = vmul.u32.u64.compose %v368, %v363
    %v373 = vextract.low.u32 %v372
    %v374 = vextract.high.u32 %v372
    %v375 = vmul.u32 %v368, %v359
    %v376 = vadd.s32 %v371, %v373
    %vm377 = vc.u32 %v371, %v373
    %v378 = vadd.s32 %v374, 1
    %v379 = vsel %vm377, %v378, %v374
    %v380 = vadd.s32 %v375, %v379
    %v381 = vadd.s32 %v380, 536870912
    %v382 = vshrl.u32 %v381, 30
    %v383 = vshll.u32 %v382, 30
    %v384 = vsub.s32 %v380, %v383
    %vm385 = vcmp.lt.s32.totalorder %v384, 0
    %v386 = vsub.s32 0, %v384
    %v387 = vsel %vm385, %v386, %v384
    %v388 = vclz %v387
    %v389 = vsub.s32 %v388, 2
    %vm390 = vcmp.gt.s32.totalorder 0, %v389
    %v391 = vsel %vm390, 0, %v389
    %v392 = vsub.s32 32, %v391
    %v393 = vshll.u32 %v384, %v391
    %v394 = vshrl.u32 %v376, %v392
    %v395 = vor.u32 %v393, %v394
    %v396 = vsub.s32 4294967266, %v391
    %v397 = vadd.s32 %v396, 127
    %v398 = vshll.u32 %v397, 23
    %v399 = vor.u32 4788187, %v398
    %v400 = vand.u32 2147483647, %v399
    %v402 = vcvt.s32.f32 %v395
    %v403 = vmul.f32 %v402, %v400
    %v404 = vxor.u32 %v403, 2147483648
    %v405 = vsel %vm322, %v404, %v403
    %v406 = vsub.s32 4, %v382
    %v407 = vsel %vm322, %v406, %v382
    %v408 = vsel %vm321, %v214, %v405
    %v409 = vsel %vm321, 0, %v407
    %v410 = vcosq.f32.pop %v408
    %v411 = vsinq.f32.pop %v408
    %vm412 = vweird.f32 %v214
    %v413 = vand.u32 %v409, 3
    %vm414 = vcmp.lt.s32.totalorder %v413, 2
    %vm415 = vcmp.eq.s32.totalorder %v413, 0
    %v416 = vxor.u32 %v411, 2147483648
    %v417 = vsel %vm415, %v410, %v416
    %vm418 = vcmp.eq.s32.totalorder %v413, 2
    %v419 = vxor.u32 %v410, 2147483648
    %v420 = vsel %vm418, %v419, %v411
    %v421 = vsel %vm414, %v417, %v420
    %v422 = vsel %vm412, nan, %v421
    %v423 = vand.u32 2147483647, %v215
    %vm424 = vcmp.le.f32.partialorder %v423, 0.7853982
    %vm425 = vcmp.lt.s32.totalorder %v215, 0
    %v426 = vand.u32 %v215, 2139095040
    %v427 = vshrl.u32 %v426, 23
    %v428 = vsub.s32 %v427, 127
    %v429 = vand.u32 2147483647, %v215
    %v430 = vand.u32 %v429, 8388607
    %v431 = vor.u32 %v430, 8388608
    %v432 = vsub.s32 0, %v431
    %v433 = vadd.s32 %v428, 1
    %vm434 = vcmp.gt.s32.totalorder %v433, 0
    %v435 = vsel %vm434, %v433, 0
    %v436 = vshrl.u32 %v435, 5
    %v437 = vand.u32 %v435, 31
    %v438 = vsub.s32 32, %v437
    %v439 = vshrl.u32 683565275, %v438
    %v440 = vshll.u32 683565275, %v437
    %v441 = vshrl.u32 2475754826, %v438
    %v442 = vor.u32 %v440, %v441
    %v443 = vshll.u32 2475754826, %v437
    %v444 = vshrl.u32 2131351028, %v438
    %v445 = vor.u32 %v443, %v444
    %v446 = vshll.u32 2131351028, %v437
    %v447 = vshrl.u32 2102212464, %v438
    %v448 = vor.u32 %v446, %v447
    %v449 = vshll.u32 2102212464, %v437
    %v450 = vshrl.u32 920167782, %v438
    %v451 = vor.u32 %v449, %v450
    %v452 = vshll.u32 920167782, %v437
    %v453 = vshrl.u32 1326507024, %v438
    %v454 = vor.u32 %v452, %v453
    %vm455 = vcmp.lt.s32.totalorder %v436, 1
    %vm456 = vcmp.lt.s32.totalorder %v436, 2
    %vm457 = vcmp.lt.s32.totalorder %v436, 3
    %vm458 = vcmp.lt.s32.totalorder %v436, 4
    %v459 = vsel %vm455, %v439, %v442
    %v460 = vsel %vm458, %v448, 2102212464
    %v461 = vsel %vm457, %v445, %v460
    %v462 = vsel %vm456, %v459, %v461
    %v463 = vsel %vm455, %v442, %v445
    %v464 = vsel %vm458, %v451, 920167782
    %v465 = vsel %vm457, %v448, %v464
    %v466 = vsel %vm456, %v463, %v465
    %v467 = vsel %vm455, %v445, %v448
    %v468 = vsel %vm458, %v454, 1326507024
    %v469 = vsel %vm457, %v451, %v468
    %v470 = vsel %vm456, %v467, %v469
    %v471 = vshll.u32 %v431, 8
    %v472 = vmul.u32.u64.compose %v471, %v470
    %v473 = vextract.low.u32 %v472
    %v474 = vextract.high.u32 %v472
    %v475 = vmul.u32.u64.compose %v471, %v466
    %v476 = vextract.low.u32 %v475
    %v477 = vextract.high.u32 %v475
    %v478 = vmul.u32 %v471, %v462
    %v479 = vadd.s32 %v474, %v476
    %vm480 = vc.u32 %v474, %v476
    %v481 = vadd.s32 %v477, 1
    %v482 = vsel %vm480, %v481, %v477
    %v483 = vadd.s32 %v478, %v482
    %v484 = vadd.s32 %v483, 536870912
    %v485 = vshrl.u32 %v484, 30
    %v486 = vshll.u32 %v485, 30
    %v487 = vsub.s32 %v483, %v486
    %vm488 = vcmp.lt.s32.totalorder %v487, 0
    %v489 = vsub.s32 0, %v487
    %v490 = vsel %vm488, %v489, %v487
    %v491 = vclz %v490
    %v492 = vsub.s32 %v491, 2
    %vm493 = vcmp.gt.s32.totalorder 0, %v492
    %v494 = vsel %vm493, 0, %v492
    %v495 = vsub.s32 32, %v494
    %v496 = vshll.u32 %v487, %v494
    %v497 = vshrl.u32 %v479, %v495
    %v498 = vor.u32 %v496, %v497
    %v499 = vsub.s32 4294967266, %v494
    %v500 = vadd.s32 %v499, 127
    %v501 = vshll.u32 %v500, 23
    %v502 = vor.u32 4788187, %v501
    %v503 = vand.u32 2147483647, %v502
    %v505 = vcvt.s32.f32 %v498
    %v506 = vmul.f32 %v505, %v503
    %v507 = vxor.u32 %v506, 2147483648
    %v508 = vsel %vm425, %v507, %v506
    %v509 = vsub.s32 4, %v485
    %v510 = vsel %vm425, %v509, %v485
    %v511 = vsel %vm424, %v215, %v508
    %v512 = vsel %vm424, 0, %v510
    %v513 = vcosq.f32.pop %v511
    %v514 = vsinq.f32.pop %v511
    %vm515 = vweird.f32 %v215
    %v516 = vand.u32 %v512, 3
    %vm517 = vcmp.lt.s32.totalorder %v516, 2
    %vm518 = vcmp.eq.s32.totalorder %v516, 0
    %v519 = vxor.u32 %v514, 2147483648
    %v520 = vsel %vm518, %v513, %v519
    %vm521 = vcmp.eq.s32.totalorder %v516, 2
    %v522 = vxor.u32 %v513, 2147483648
    %v523 = vsel %vm521, %v522, %v514
    %v524 = vsel %vm517, %v520, %v523
    %v525 = vsel %vm515, nan, %v524
    %v526 = vand.u32 2147483647, %v216
    %vm527 = vcmp.le.f32.partialorder %v526, 0.7853982
    %vm528 = vcmp.lt.s32.totalorder %v216, 0
    %v529 = vand.u32 %v216, 2139095040
    %v530 = vshrl.u32 %v529, 23
    %v531 = vsub.s32 %v530, 127
    %v532 = vand.u32 2147483647, %v216
    %v533 = vand.u32 %v532, 8388607
    %v534 = vor.u32 %v533, 8388608
    %v535 = vsub.s32 0, %v534
    %v536 = vadd.s32 %v531, 1
    %vm537 = vcmp.gt.s32.totalorder %v536, 0
    %v538 = vsel %vm537, %v536, 0
    %v539 = vshrl.u32 %v538, 5
    %v540 = vand.u32 %v538, 31
    %v541 = vsub.s32 32, %v540
    %v542 = vshrl.u32 683565275, %v541
    %v543 = vshll.u32 683565275, %v540
    %v544 = vshrl.u32 2475754826, %v541
    %v545 = vor.u32 %v543, %v544
    %v546 = vshll.u32 2475754826, %v540
    %v547 = vshrl.u32 2131351028, %v541
    %v548 = vor.u32 %v546, %v547
    %v549 = vshll.u32 2131351028, %v540
    %v550 = vshrl.u32 2102212464, %v541
    %v551 = vor.u32 %v549, %v550
    %v552 = vshll.u32 2102212464, %v540
    %v553 = vshrl.u32 920167782, %v541
    %v554 = vor.u32 %v552, %v553
    %v555 = vshll.u32 920167782, %v540
    %v556 = vshrl.u32 1326507024, %v541
    %v557 = vor.u32 %v555, %v556
    %vm558 = vcmp.lt.s32.totalorder %v539, 1
    %vm559 = vcmp.lt.s32.totalorder %v539, 2
    %vm560 = vcmp.lt.s32.totalorder %v539, 3
    %vm561 = vcmp.lt.s32.totalorder %v539, 4
    %v562 = vsel %vm558, %v542, %v545
    %v563 = vsel %vm561, %v551, 2102212464
    %v564 = vsel %vm560, %v548, %v563
    %v565 = vsel %vm559, %v562, %v564
    %v566 = vsel %vm558, %v545, %v548
    %v567 = vsel %vm561, %v554, 920167782
    %v568 = vsel %vm560, %v551, %v567
    %v569 = vsel %vm559, %v566, %v568
    %v570 = vsel %vm558, %v548, %v551
    %v571 = vsel %vm561, %v557, 1326507024
    %v572 = vsel %vm560, %v554, %v571
    %v573 = vsel %vm559, %v570, %v572
    %v574 = vshll.u32 %v534, 8
    %v575 = vmul.u32.u64.compose %v574, %v573
    %v576 = vextract.low.u32 %v575
    %v577 = vextract.high.u32 %v575
    %v578 = vmul.u32.u64.compose %v574, %v569
    %v579 = vextract.low.u32 %v578
    %v580 = vextract.high.u32 %v578
    %v581 = vmul.u32 %v574, %v565
    %v582 = vadd.s32 %v577, %v579
    %vm583 = vc.u32 %v577, %v579
    %v584 = vadd.s32 %v580, 1
    %v585 = vsel %vm583, %v584, %v580
    %v586 = vadd.s32 %v581, %v585
    %v587 = vadd.s32 %v586, 536870912
    %v588 = vshrl.u32 %v587, 30
    %v589 = vshll.u32 %v588, 30
    %v590 = vsub.s32 %v586, %v589
    %vm591 = vcmp.lt.s32.totalorder %v590, 0
    %v592 = vsub.s32 0, %v590
    %v593 = vsel %vm591, %v592, %v590
    %v594 = vclz %v593
    %v595 = vsub.s32 %v594, 2
    %vm596 = vcmp.gt.s32.totalorder 0, %v595
    %v597 = vsel %vm596, 0, %v595
    %v598 = vsub.s32 32, %v597
    %v599 = vshll.u32 %v590, %v597
    %v600 = vshrl.u32 %v582, %v598
    %v601 = vor.u32 %v599, %v600
    %v602 = vsub.s32 4294967266, %v597
    %v603 = vadd.s32 %v602, 127
    %v604 = vshll.u32 %v603, 23
    %v605 = vor.u32 4788187, %v604
    %v606 = vand.u32 2147483647, %v605
    %v608 = vcvt.s32.f32 %v601
    %v609 = vmul.f32 %v608, %v606
    %v610 = vxor.u32 %v609, 2147483648
    %v611 = vsel %vm528, %v610, %v609
    %v612 = vsub.s32 4, %v588
    %v613 = vsel %vm528, %v612, %v588
    %v614 = vsel %vm527, %v216, %v611
    %v615 = vsel %vm527, 0, %v613
    %v616 = vcosq.f32.pop %v614
    %v617 = vsinq.f32.pop %v614
    %vm618 = vweird.f32 %v216
    %v619 = vand.u32 %v615, 3
    %vm620 = vcmp.lt.s32.totalorder %v619, 2
    %vm621 = vcmp.eq.s32.totalorder %v619, 0
    %v622 = vxor.u32 %v617, 2147483648
    %v623 = vsel %vm621, %v616, %v622
    %vm624 = vcmp.eq.s32.totalorder %v619, 2
    %v625 = vxor.u32 %v616, 2147483648
    %v626 = vsel %vm624, %v625, %v617
    %v627 = vsel %vm620, %v623, %v626
    %v628 = vsel %vm618, nan, %v627
    %v629 = vmul.f32 %v191, %v319
    %v630 = vmul.f32 %v198, %v422
    %v631 = vmul.f32 %v205, %v525
    %v632 = vmul.f32 %v212, %v628
    %v633 = vand.u32 2147483647, %v213
    %vm634 = vcmp.le.f32.partialorder %v633, 0.7853982
    %vm635 = vcmp.lt.s32.totalorder %v213, 0
    %v636 = vand.u32 %v213, 2139095040
    %v637 = vshrl.u32 %v636, 23
    %v638 = vsub.s32 %v637, 127
    %v639 = vand.u32 2147483647, %v213
    %v640 = vand.u32 %v639, 8388607
    %v641 = vor.u32 %v640, 8388608
    %v642 = vsub.s32 0, %v641
    %v643 = vadd.s32 %v638, 1
    %vm644 = vcmp.gt.s32.totalorder %v643, 0
    %v645 = vsel %vm644, %v643, 0
    %v646 = vshrl.u32 %v645, 5
    %v647 = vand.u32 %v645, 31
    %v648 = vsub.s32 32, %v647
    %v649 = vshrl.u32 683565275, %v648
    %v650 = vshll.u32 683565275, %v647
    %v651 = vshrl.u32 2475754826, %v648
    %v652 = vor.u32 %v650, %v651
    %v653 = vshll.u32 2475754826, %v647
    %v654 = vshrl.u32 2131351028, %v648
    %v655 = vor.u32 %v653, %v654
    %v656 = vshll.u32 2131351028, %v647
    %v657 = vshrl.u32 2102212464, %v648
    %v658 = vor.u32 %v656, %v657
    %v659 = vshll.u32 2102212464, %v647
    %v660 = vshrl.u32 920167782, %v648
    %v661 = vor.u32 %v659, %v660
    %v662 = vshll.u32 920167782, %v647
    %v663 = vshrl.u32 1326507024, %v648
    %v664 = vor.u32 %v662, %v663
    %vm665 = vcmp.lt.s32.totalorder %v646, 1
    %vm666 = vcmp.lt.s32.totalorder %v646, 2
    %vm667 = vcmp.lt.s32.totalorder %v646, 3
    %vm668 = vcmp.lt.s32.totalorder %v646, 4
    %v669 = vsel %vm665, %v649, %v652
    %v670 = vsel %vm668, %v658, 2102212464
    %v671 = vsel %vm667, %v655, %v670
    %v672 = vsel %vm666, %v669, %v671
    %v673 = vsel %vm665, %v652, %v655
    %v674 = vsel %vm668, %v661, 920167782
    %v675 = vsel %vm667, %v658, %v674
    %v676 = vsel %vm666, %v673, %v675
    %v677 = vsel %vm665, %v655, %v658
    %v678 = vsel %vm668, %v664, 1326507024
    %v679 = vsel %vm667, %v661, %v678
    %v680 = vsel %vm666, %v677, %v679
    %v681 = vshll.u32 %v641, 8
    %v682 = vmul.u32.u64.compose %v681, %v680
    %v683 = vextract.low.u32 %v682
    %v684 = vextract.high.u32 %v682
    %v685 = vmul.u32.u64.compose %v681, %v676
    %v686 = vextract.low.u32 %v685
    %v687 = vextract.high.u32 %v685
    %v688 = vmul.u32 %v681, %v672
    %v689 = vadd.s32 %v684, %v686
    %vm690 = vc.u32 %v684, %v686
    %v691 = vadd.s32 %v687, 1
    %v692 = vsel %vm690, %v691, %v687
    %v693 = vadd.s32 %v688, %v692
    %v694 = vadd.s32 %v693, 536870912
    %v695 = vshrl.u32 %v694, 30
    %v696 = vshll.u32 %v695, 30
    %v697 = vsub.s32 %v693, %v696
    %vm698 = vcmp.lt.s32.totalorder %v697, 0
    %v699 = vsub.s32 0, %v697
    %v700 = vsel %vm698, %v699, %v697
    %v701 = vclz %v700
    %v702 = vsub.s32 %v701, 2
    %vm703 = vcmp.gt.s32.totalorder 0, %v702
    %v704 = vsel %vm703, 0, %v702
    %v705 = vsub.s32 32, %v704
    %v706 = vshll.u32 %v697, %v704
    %v707 = vshrl.u32 %v689, %v705
    %v708 = vor.u32 %v706, %v707
    %v709 = vsub.s32 4294967266, %v704
    %v710 = vadd.s32 %v709, 127
    %v711 = vshll.u32 %v710, 23
    %v712 = vor.u32 4788187, %v711
    %v713 = vand.u32 2147483647, %v712
    %v715 = vcvt.s32.f32 %v708
    %v716 = vmul.f32 %v715, %v713
    %v717 = vxor.u32 %v716, 2147483648
    %v718 = vsel %vm635, %v717, %v716
    %v719 = vsub.s32 4, %v695
    %v720 = vsel %vm635, %v719, %v695
    %v721 = vsel %vm634, %v213, %v718
    %v722 = vsel %vm634, 0, %v720
    %v723 = vcosq.f32.pop %v721
    %v724 = vsinq.f32.pop %v721
    %vm725 = vweird.f32 %v213
    %v726 = vadd.s32 %v722, 3
    %v727 = vand.u32 %v726, 3
    %vm728 = vcmp.lt.s32.totalorder %v727, 2
    %vm729 = vcmp.eq.s32.totalorder %v727, 0
    %v730 = vxor.u32 %v724, 2147483648
    %v731 = vsel %vm729, %v723, %v730
    %vm732 = vcmp.eq.s32.totalorder %v727, 2
    %v733 = vxor.u32 %v723, 2147483648
    %v734 = vsel %vm732, %v733, %v724
    %v735 = vsel %vm728, %v731, %v734
    %v736 = vsel %vm725, nan, %v735
    %v737 = vand.u32 2147483647, %v214
    %vm738 = vcmp.le.f32.partialorder %v737, 0.7853982
    %vm739 = vcmp.lt.s32.totalorder %v214, 0
    %v740 = vand.u32 %v214, 2139095040
    %v741 = vshrl.u32 %v740, 23
    %v742 = vsub.s32 %v741, 127
    %v743 = vand.u32 2147483647, %v214
    %v744 = vand.u32 %v743, 8388607
    %v745 = vor.u32 %v744, 8388608
    %v746 = vsub.s32 0, %v745
    %v747 = vadd.s32 %v742, 1
    %vm748 = vcmp.gt.s32.totalorder %v747, 0
    %v749 = vsel %vm748, %v747, 0
    %v750 = vshrl.u32 %v749, 5
    %v751 = vand.u32 %v749, 31
    %v752 = vsub.s32 32, %v751
    %v753 = vshrl.u32 683565275, %v752
    %v754 = vshll.u32 683565275, %v751
    %v755 = vshrl.u32 2475754826, %v752
    %v756 = vor.u32 %v754, %v755
    %v757 = vshll.u32 2475754826, %v751
    %v758 = vshrl.u32 2131351028, %v752
    %v759 = vor.u32 %v757, %v758
    %v760 = vshll.u32 2131351028, %v751
    %v761 = vshrl.u32 2102212464, %v752
    %v762 = vor.u32 %v760, %v761
    %v763 = vshll.u32 2102212464, %v751
    %v764 = vshrl.u32 920167782, %v752
    %v765 = vor.u32 %v763, %v764
    %v766 = vshll.u32 920167782, %v751
    %v767 = vshrl.u32 1326507024, %v752
    %v768 = vor.u32 %v766, %v767
    %vm769 = vcmp.lt.s32.totalorder %v750, 1
    %vm770 = vcmp.lt.s32.totalorder %v750, 2
    %vm771 = vcmp.lt.s32.totalorder %v750, 3
    %vm772 = vcmp.lt.s32.totalorder %v750, 4
    %v773 = vsel %vm769, %v753, %v756
    %v774 = vsel %vm772, %v762, 2102212464
    %v775 = vsel %vm771, %v759, %v774
    %v776 = vsel %vm770, %v773, %v775
    %v777 = vsel %vm769, %v756, %v759
    %v778 = vsel %vm772, %v765, 920167782
    %v779 = vsel %vm771, %v762, %v778
    %v780 = vsel %vm770, %v777, %v779
    %v781 = vsel %vm769, %v759, %v762
    %v782 = vsel %vm772, %v768, 1326507024
    %v783 = vsel %vm771, %v765, %v782
    %v784 = vsel %vm770, %v781, %v783
    %v785 = vshll.u32 %v745, 8
    %v786 = vmul.u32.u64.compose %v785, %v784
    %v787 = vextract.low.u32 %v786
    %v788 = vextract.high.u32 %v786
    %v789 = vmul.u32.u64.compose %v785, %v780
    %v790 = vextract.low.u32 %v789
    %v791 = vextract.high.u32 %v789
    %v792 = vmul.u32 %v785, %v776
    %v793 = vadd.s32 %v788, %v790
    %vm794 = vc.u32 %v788, %v790
    %v795 = vadd.s32 %v791, 1
    %v796 = vsel %vm794, %v795, %v791
    %v797 = vadd.s32 %v792, %v796
    %v798 = vadd.s32 %v797, 536870912
    %v799 = vshrl.u32 %v798, 30
    %v800 = vshll.u32 %v799, 30
    %v801 = vsub.s32 %v797, %v800
    %vm802 = vcmp.lt.s32.totalorder %v801, 0
    %v803 = vsub.s32 0, %v801
    %v804 = vsel %vm802, %v803, %v801
    %v805 = vclz %v804
    %v806 = vsub.s32 %v805, 2
    %vm807 = vcmp.gt.s32.totalorder 0, %v806
    %v808 = vsel %vm807, 0, %v806
    %v809 = vsub.s32 32, %v808
    %v810 = vshll.u32 %v801, %v808
    %v811 = vshrl.u32 %v793, %v809
    %v812 = vor.u32 %v810, %v811
    %v813 = vsub.s32 4294967266, %v808
    %v814 = vadd.s32 %v813, 127
    %v815 = vshll.u32 %v814, 23
    %v816 = vor.u32 4788187, %v815
    %v817 = vand.u32 2147483647, %v816
    %v819 = vcvt.s32.f32 %v812
    %v820 = vmul.f32 %v819, %v817
    %v821 = vxor.u32 %v820, 2147483648
    %v822 = vsel %vm739, %v821, %v820
    %v823 = vsub.s32 4, %v799
    %v824 = vsel %vm739, %v823, %v799
    %v825 = vsel %vm738, %v214, %v822
    %v826 = vsel %vm738, 0, %v824
    %v827 = vcosq.f32.pop %v825
    %v828 = vsinq.f32.pop %v825
    %vm829 = vweird.f32 %v214
    %v830 = vadd.s32 %v826, 3
    %v831 = vand.u32 %v830, 3
    %vm832 = vcmp.lt.s32.totalorder %v831, 2
    %vm833 = vcmp.eq.s32.totalorder %v831, 0
    %v834 = vxor.u32 %v828, 2147483648
    %v835 = vsel %vm833, %v827, %v834
    %vm836 = vcmp.eq.s32.totalorder %v831, 2
    %v837 = vxor.u32 %v827, 2147483648
    %v838 = vsel %vm836, %v837, %v828
    %v839 = vsel %vm832, %v835, %v838
    %v840 = vsel %vm829, nan, %v839
    %v841 = vand.u32 2147483647, %v215
    %vm842 = vcmp.le.f32.partialorder %v841, 0.7853982
    %vm843 = vcmp.lt.s32.totalorder %v215, 0
    %v844 = vand.u32 %v215, 2139095040
    %v845 = vshrl.u32 %v844, 23
    %v846 = vsub.s32 %v845, 127
    %v847 = vand.u32 2147483647, %v215
    %v848 = vand.u32 %v847, 8388607
    %v849 = vor.u32 %v848, 8388608
    %v850 = vsub.s32 0, %v849
    %v851 = vadd.s32 %v846, 1
    %vm852 = vcmp.gt.s32.totalorder %v851, 0
    %v853 = vsel %vm852, %v851, 0
    %v854 = vshrl.u32 %v853, 5
    %v855 = vand.u32 %v853, 31
    %v856 = vsub.s32 32, %v855
    %v857 = vshrl.u32 683565275, %v856
    %v858 = vshll.u32 683565275, %v855
    %v859 = vshrl.u32 2475754826, %v856
    %v860 = vor.u32 %v858, %v859
    %v861 = vshll.u32 2475754826, %v855
    %v862 = vshrl.u32 2131351028, %v856
    %v863 = vor.u32 %v861, %v862
    %v864 = vshll.u32 2131351028, %v855
    %v865 = vshrl.u32 2102212464, %v856
    %v866 = vor.u32 %v864, %v865
    %v867 = vshll.u32 2102212464, %v855
    %v868 = vshrl.u32 920167782, %v856
    %v869 = vor.u32 %v867, %v868
    %v870 = vshll.u32 920167782, %v855
    %v871 = vshrl.u32 1326507024, %v856
    %v872 = vor.u32 %v870, %v871
    %vm873 = vcmp.lt.s32.totalorder %v854, 1
    %vm874 = vcmp.lt.s32.totalorder %v854, 2
    %vm875 = vcmp.lt.s32.totalorder %v854, 3
    %vm876 = vcmp.lt.s32.totalorder %v854, 4
    %v877 = vsel %vm873, %v857, %v860
    %v878 = vsel %vm876, %v866, 2102212464
    %v879 = vsel %vm875, %v863, %v878
    %v880 = vsel %vm874, %v877, %v879
    %v881 = vsel %vm873, %v860, %v863
    %v882 = vsel %vm876, %v869, 920167782
    %v883 = vsel %vm875, %v866, %v882
    %v884 = vsel %vm874, %v881, %v883
    %v885 = vsel %vm873, %v863, %v866
    %v886 = vsel %vm876, %v872, 1326507024
    %v887 = vsel %vm875, %v869, %v886
    %v888 = vsel %vm874, %v885, %v887
    %v889 = vshll.u32 %v849, 8
    %v890 = vmul.u32.u64.compose %v889, %v888
    %v891 = vextract.low.u32 %v890
    %v892 = vextract.high.u32 %v890
    %v893 = vmul.u32.u64.compose %v889, %v884
    %v894 = vextract.low.u32 %v893
    %v895 = vextract.high.u32 %v893
    %v896 = vmul.u32 %v889, %v880
    %v897 = vadd.s32 %v892, %v894
    %vm898 = vc.u32 %v892, %v894
    %v899 = vadd.s32 %v895, 1
    %v900 = vsel %vm898, %v899, %v895
    %v901 = vadd.s32 %v896, %v900
    %v902 = vadd.s32 %v901, 536870912
    %v903 = vshrl.u32 %v902, 30
    %v904 = vshll.u32 %v903, 30
    %v905 = vsub.s32 %v901, %v904
    %vm906 = vcmp.lt.s32.totalorder %v905, 0
    %v907 = vsub.s32 0, %v905
    %v908 = vsel %vm906, %v907, %v905
    %v909 = vclz %v908
    %v910 = vsub.s32 %v909, 2
    %vm911 = vcmp.gt.s32.totalorder 0, %v910
    %v912 = vsel %vm911, 0, %v910
    %v913 = vsub.s32 32, %v912
    %v914 = vshll.u32 %v905, %v912
    %v915 = vshrl.u32 %v897, %v913
    %v916 = vor.u32 %v914, %v915
    %v917 = vsub.s32 4294967266, %v912
    %v918 = vadd.s32 %v917, 127
    %v919 = vshll.u32 %v918, 23
    %v920 = vor.u32 4788187, %v919
    %v921 = vand.u32 2147483647, %v920
    %v923 = vcvt.s32.f32 %v916
    %v924 = vmul.f32 %v923, %v921
    %v925 = vxor.u32 %v924, 2147483648
    %v926 = vsel %vm843, %v925, %v924
    %v927 = vsub.s32 4, %v903
    %v928 = vsel %vm843, %v927, %v903
    %v929 = vsel %vm842, %v215, %v926
    %v930 = vsel %vm842, 0, %v928
    %v931 = vcosq.f32.pop %v929
    %v932 = vsinq.f32.pop %v929
    %vm933 = vweird.f32 %v215
    %v934 = vadd.s32 %v930, 3
    %v935 = vand.u32 %v934, 3
    %vm936 = vcmp.lt.s32.totalorder %v935, 2
    %vm937 = vcmp.eq.s32.totalorder %v935, 0
    %v938 = vxor.u32 %v932, 2147483648
    %v939 = vsel %vm937, %v931, %v938
    %vm940 = vcmp.eq.s32.totalorder %v935, 2
    %v941 = vxor.u32 %v931, 2147483648
    %v942 = vsel %vm940, %v941, %v932
    %v943 = vsel %vm936, %v939, %v942
    %v944 = vsel %vm933, nan, %v943
    %v945 = vand.u32 2147483647, %v216
    %vm946 = vcmp.le.f32.partialorder %v945, 0.7853982
    %vm947 = vcmp.lt.s32.totalorder %v216, 0
    %v948 = vand.u32 %v216, 2139095040
    %v949 = vshrl.u32 %v948, 23
    %v950 = vsub.s32 %v949, 127
    %v951 = vand.u32 2147483647, %v216
    %v952 = vand.u32 %v951, 8388607
    %v953 = vor.u32 %v952, 8388608
    %v954 = vsub.s32 0, %v953
    %v955 = vadd.s32 %v950, 1
    %vm956 = vcmp.gt.s32.totalorder %v955, 0
    %v957 = vsel %vm956, %v955, 0
    %v958 = vshrl.u32 %v957, 5
    %v959 = vand.u32 %v957, 31
    %v960 = vsub.s32 32, %v959
    %v961 = vshrl.u32 683565275, %v960
    %v962 = vshll.u32 683565275, %v959
    %v963 = vshrl.u32 2475754826, %v960
    %v964 = vor.u32 %v962, %v963
    %v965 = vshll.u32 2475754826, %v959
    %v966 = vshrl.u32 2131351028, %v960
    %v967 = vor.u32 %v965, %v966
    %v968 = vshll.u32 2131351028, %v959
    %v969 = vshrl.u32 2102212464, %v960
    %v970 = vor.u32 %v968, %v969
    %v971 = vshll.u32 2102212464, %v959
    %v972 = vshrl.u32 920167782, %v960
    %v973 = vor.u32 %v971, %v972
    %v974 = vshll.u32 920167782, %v959
    %v975 = vshrl.u32 1326507024, %v960
    %v976 = vor.u32 %v974, %v975
    %vm977 = vcmp.lt.s32.totalorder %v958, 1
    %vm978 = vcmp.lt.s32.totalorder %v958, 2
    %vm979 = vcmp.lt.s32.totalorder %v958, 3
    %vm980 = vcmp.lt.s32.totalorder %v958, 4
    %v981 = vsel %vm977, %v961, %v964
    %v982 = vsel %vm980, %v970, 2102212464
    %v983 = vsel %vm979, %v967, %v982
    %v984 = vsel %vm978, %v981, %v983
    %v985 = vsel %vm977, %v964, %v967
    %v986 = vsel %vm980, %v973, 920167782
    %v987 = vsel %vm979, %v970, %v986
    %v988 = vsel %vm978, %v985, %v987
    %v989 = vsel %vm977, %v967, %v970
    %v990 = vsel %vm980, %v976, 1326507024
    %v991 = vsel %vm979, %v973, %v990
    %v992 = vsel %vm978, %v989, %v991
    %v993 = vshll.u32 %v953, 8
    %v994 = vmul.u32.u64.compose %v993, %v992
    %v995 = vextract.low.u32 %v994
    %v996 = vextract.high.u32 %v994
    %v997 = vmul.u32.u64.compose %v993, %v988
    %v998 = vextract.low.u32 %v997
    %v999 = vextract.high.u32 %v997
    %v1000 = vmul.u32 %v993, %v984
    %v1001 = vadd.s32 %v996, %v998
    %vm1002 = vc.u32 %v996, %v998
    %v1003 = vadd.s32 %v999, 1
    %v1004 = vsel %vm1002, %v1003, %v999
    %v1005 = vadd.s32 %v1000, %v1004
    %v1006 = vadd.s32 %v1005, 536870912
    %v1007 = vshrl.u32 %v1006, 30
    %v1008 = vshll.u32 %v1007, 30
    %v1009 = vsub.s32 %v1005, %v1008
    %vm1010 = vcmp.lt.s32.totalorder %v1009, 0
    %v1011 = vsub.s32 0, %v1009
    %v1012 = vsel %vm1010, %v1011, %v1009
    %v1013 = vclz %v1012
    %v1014 = vsub.s32 %v1013, 2
    %vm1015 = vcmp.gt.s32.totalorder 0, %v1014
    %v1016 = vsel %vm1015, 0, %v1014
    %v1017 = vsub.s32 32, %v1016
    %v1018 = vshll.u32 %v1009, %v1016
    %v1019 = vshrl.u32 %v1001, %v1017
    %v1020 = vor.u32 %v1018, %v1019
    %v1021 = vsub.s32 4294967266, %v1016
    %v1022 = vadd.s32 %v1021, 127
    %v1023 = vshll.u32 %v1022, 23
    %v1024 = vor.u32 4788187, %v1023
    %v1025 = vand.u32 2147483647, %v1024
    %v1027 = vcvt.s32.f32 %v1020
    %v1028 = vmul.f32 %v1027, %v1025
    %v1029 = vxor.u32 %v1028, 2147483648
    %v1030 = vsel %vm947, %v1029, %v1028
    %v1031 = vsub.s32 4, %v1007
    %v1032 = vsel %vm947, %v1031, %v1007
    %v1033 = vsel %vm946, %v216, %v1030
    %v1034 = vsel %vm946, 0, %v1032
    %v1035 = vcosq.f32.pop %v1033
    %v1036 = vsinq.f32.pop %v1033
    %vm1037 = vweird.f32 %v216
    %v1038 = vadd.s32 %v1034, 3
    %v1039 = vand.u32 %v1038, 3
    %vm1040 = vcmp.lt.s32.totalorder %v1039, 2
    %vm1041 = vcmp.eq.s32.totalorder %v1039, 0
    %v1042 = vxor.u32 %v1036, 2147483648
    %v1043 = vsel %vm1041, %v1035, %v1042
    %vm1044 = vcmp.eq.s32.totalorder %v1039, 2
    %v1045 = vxor.u32 %v1035, 2147483648
    %v1046 = vsel %vm1044, %v1045, %v1036
    %v1047 = vsel %vm1040, %v1043, %v1046
    %v1048 = vsel %vm1037, nan, %v1047
    %v1049 = vmul.f32 %v191, %v736
    %v1050 = vmul.f32 %v198, %v840
    %v1051 = vmul.f32 %v205, %v944
    %v1052 = vmul.f32 %v212, %v1048
    %v1053 = vld [vmem:[#allocation4] sm:$0xff]
    %v1054 = vld [vmem:[#allocation4 + $0x8] sm:$0xff]
    %v1055 = vmul.f32 %v629, 0.1
    %v1056 = vmul.f32 %v630, 0.1
    %v1057 = vmul.f32 %v631, 0.1
    %v1058 = vmul.f32 %v632, 0.1
    %v1063 = vcombine.low %v1055, %v1056
    %v1064 = vcombine.low %v1057, %v1058
    %v1066 = vunpack.c.l.s4 1983009808
    %v1067 = vunpack.c.0.s8 %v1066
    %v1068 = vlaneseq
    %v1069 = vshrl.u32 %v1068, 7
    %v1070 = vsub.s32 %v1067, %v1069
    %v1071 = vrot.slane %v1063, %v1070
    %v1073 = vunpack.c.l.s4 1983009808
    %v1074 = vunpack.c.0.s8 %v1073
    %v1075 = vlaneseq
    %v1076 = vshrl.u32 %v1075, 7
    %v1077 = vsub.s32 %v1074, %v1076
    %v1078 = vrot.slane %v1064, %v1077
    %v1079 = vcombine.low %v1071, %v1078
    %v1081 = vadd.f32 %v1053, %v1079
    %1082 = vst [vmem:[#allocation7] sm:$0xff] %v1081
    %v1083 = vmul.f32 %v1049, 0.1
    %v1084 = vmul.f32 %v1050, 0.1
    %v1085 = vmul.f32 %v1051, 0.1
    %v1086 = vmul.f32 %v1052, 0.1
    %v1091 = vcombine.low %v1083, %v1084
    %v1092 = vcombine.low %v1085, %v1086
    %v1094 = vunpack.c.l.s4 1983009808
    %v1095 = vunpack.c.0.s8 %v1094
    %v1096 = vlaneseq
    %v1097 = vshrl.u32 %v1096, 7
    %v1098 = vsub.s32 %v1095, %v1097
    %v1099 = vrot.slane %v1091, %v1098
    %v1101 = vunpack.c.l.s4 1983009808
    %v1102 = vunpack.c.0.s8 %v1101
    %v1103 = vlaneseq
    %v1104 = vshrl.u32 %v1103, 7
    %v1105 = vsub.s32 %v1102, %v1104
    %v1106 = vrot.slane %v1092, %v1105
    %v1107 = vcombine.low %v1099, %v1106
    %v1109 = vadd.f32 %v1054, %v1107
    %1110 = vst [vmem:[#allocation7 + $0x8] sm:$0xff] %v1109
    // Predicated region
    $region10: #{tpu_custom_call.1} parent=1 // pred_check
      _
    $region11: #{tpu_custom_call.1} parent=1 // pred_check_branch
      %1112 = sbr.rel (0) target = $region13
    $region12: #{tpu_custom_call.1} parent=1 // pred_region
      %s1114 = ssub.s32 256, 256
      %1115 = vsyncadd [#allocation6], %s1114
      %s1117 = sshll.u32 [#allocation7], 4
      %s1118 = int_to_ptr.vmem [resolvable:$true] %s1117
      %1120 = dma.vmem_to_hbm [thread:$0]  %s1118, 256, %s2, [#allocation6]
    $region13: #{tpu_custom_call.1} parent=1 // pred_fallthru
      _
    // Predicated region
    $region14: #{tpu_custom_call.1} parent=1 // pred_check
      _
    $region15: #{tpu_custom_call.1} parent=1 // pred_check_branch
      %1122 = sbr.rel (0) target = $region17
    $region16: #{tpu_custom_call.1} parent=1 // pred_region
      %1123 = dma.done [#allocation6], 256
    $region17: #{tpu_custom_call.1} parent=1 // pred_fallthru
      _
    %1124 = vsyncpa [#allocation5], 1
    %1125 = vsyncpa [#allocation6], 1

</llo_original>
